<compile_context>
chip_gen: v6e
topology: v6e:2x2x1
jax: 0.10.0
libtpu: 0.0.40
codegen_flags: <defaults>
</compile_context>

<pallas_src>
import functools

import jax
import jax.numpy as jnp
from jax import lax
from jax.experimental import pallas as pl
from jax.experimental.pallas import tpu as pltpu


_GATHER_GROUP = 8  # rows per DMA wave in the HBM-gather path


def _round_up(x: int, m: int) -> int:
    return ((x + m - 1) // m) * m


def _vmem_capacity_bytes() -> int:
    """Generation-aware VMEM capacity (128 MiB v5e/v6e, 64 MiB v7x per TC)."""
    try:
        return int(pltpu.get_tpu_info().vmem_capacity_bytes)
    except Exception:  # pragma: no cover - conservative fallback
        return 64 << 20


# ----------------------------------------------------------------------------
# Path A: small vocabulary -> MXU one-hot matmul.
# ----------------------------------------------------------------------------
def _onehot_matmul_kernel(idx_ref, emb_ref, out_ref):
    """out = onehot(idx) @ table for one token block.

    idx_ref : VMEM block (tokens_per_block, 1) int32
    emb_ref : VMEM whole table (V, D), single-buffered (not pipelined)
    out_ref : VMEM output block (tokens_per_block, D)
    """
    idx = idx_ref[...]                                   # (tpb, 1)
    tpb = idx.shape[0]
    vocab = emb_ref.shape[0]
    onehot = (idx == lax.broadcasted_iota(jnp.int32, (tpb, vocab), 1))
    onehot = onehot.astype(emb_ref.dtype)
    out_ref[...] = jnp.dot(
        onehot, emb_ref[...], preferred_element_type=jnp.float32
    ).astype(out_ref.dtype)


# ----------------------------------------------------------------------------
# Path B: large vocabulary -> HBM-resident table + per-row DMA gather.
# ----------------------------------------------------------------------------
def _hbm_gather_kernel(idx_ref, emb_hbm, out_ref, copy_sems, *,
                       tokens_per_block):
    """Gather rows of an HBM-resident table into the output VMEM block.

    idx_ref   : SMEM scalar-prefetch ref, (n_padded,) int32 token ids
    emb_hbm   : HBM ref (V, D)  (memory_space=pl.ANY; never copied wholesale)
    out_ref   : VMEM output block (tokens_per_block, D)
    copy_sems : DMA semaphores, shape (2, _GATHER_GROUP)
    """
    block_start = pl.program_id(0) * tokens_per_block
    n_groups = tokens_per_block // _GATHER_GROUP

    def start_group(g, slot):
        base = block_start + g * _GATHER_GROUP
        for r in range(_GATHER_GROUP):
            tok = idx_ref[base + r]
            pltpu.make_async_copy(
                emb_hbm.at[tok],
                out_ref.at[g * _GATHER_GROUP + r],
                copy_sems.at[slot, r],
            ).start()

    def wait_group(g, slot):
        for r in range(_GATHER_GROUP):
            # Placeholder src index 0: wait only needs matching transfer shape.
            pltpu.make_async_copy(
                emb_hbm.at[0],
                out_ref.at[g * _GATHER_GROUP + r],
                copy_sems.at[slot, r],
            ).wait()

    # Prime the first wave, then double-buffer waves of _GATHER_GROUP DMAs so
    # the next group's row fetches overlap the current group's completion.
    start_group(0, 0)

    def body(g, carry):
        slot = g % 2

        @pl.when(g + 1 < n_groups)
        def _():
            start_group(g + 1, (g + 1) % 2)

        wait_group(g, slot)
        return carry

    lax.fori_loop(0, n_groups, body, 0)


# ----------------------------------------------------------------------------
# Wrapper (== Word2Vec.forward: self.embeddings(inputs))
# ----------------------------------------------------------------------------
def word2vec_forward(embedding_table: jax.Array, inputs: jax.Array, *,
                     tokens_per_block: int = 512,
                     small_vocab_threshold: int = 2048) -> jax.Array:
    """Pallas equivalent of Word2Vec.forward (embedding row gather)."""
    vocab_size, embedding_dim = embedding_table.shape
    orig_shape = inputs.shape

    # Flatten tokens; clamp to [0, V) (torch raises on OOB — we clamp instead).
    flat_idx = jnp.clip(inputs.reshape(-1).astype(jnp.int32), 0, vocab_size - 1)
    n_tokens = int(flat_idx.shape[0])

    # Adaptive block size: large enough to amortize ~0.35us/step grid overhead,
    # but no bigger than the (8-rounded) token count so tiny calls need no
    # token padding at all.
    tpb = min(_round_up(tokens_per_block, _GATHER_GROUP),
              _round_up(n_tokens, _GATHER_GROUP))
    n_padded = _round_up(n_tokens, tpb)
    if n_padded != n_tokens:
        flat_idx = jnp.pad(flat_idx, (0, n_padded - n_tokens))  # pad w/ idx 0
    grid = (n_padded // tpb,)

    itemsize = jnp.dtype(embedding_table.dtype).itemsize
    table_bytes = vocab_size * embedding_dim * itemsize
    vmem_cap = _vmem_capacity_bytes()

    # Output keeps the true embedding_dim (full-extent block dim is legal even
    # when < 128 lanes) — no lane padding, no post-kernel column slice.
    out_shape = jax.ShapeDtypeStruct((n_padded, embedding_dim),
                                     embedding_table.dtype)

    use_mxu_path = (vocab_size <= small_vocab_threshold
                    and table_bytes <= vmem_cap // 4)

    if use_mxu_path:
        # ---- Path A: one-hot matmul; tiny table stays VMEM-resident. -------
        # Note: with dimension_semantics=("parallel",) the table is replicated
        # into each TensorCore's VMEM on v7x — acceptable because this path is
        # only taken for small tables.
        out_block_bytes = tpb * embedding_dim * itemsize
        vmem_budget = table_bytes + 2 * (out_block_bytes + tpb * 4) + (4 << 20)
        vmem_limit = int(min(max(vmem_budget, 16 << 20), int(vmem_cap * 0.9)))

        out_padded = pl.pallas_call(
            _onehot_matmul_kernel,
            out_shape=out_shape,
            grid=grid,
            in_specs=[
                pl.BlockSpec((tpb, 1), lambda i: (i, 0)),
                # Whole table resident in VMEM, single-buffered.
                pl.BlockSpec(memory_space=pltpu.MemorySpace.VMEM),
            ],
            out_specs=pl.BlockSpec((tpb, embedding_dim), lambda i: (i, 0)),
            compiler_params=pltpu.CompilerParams(
                dimension_semantics=("parallel",),
                vmem_limit_bytes=vmem_limit,
            ),
        )(flat_idx.reshape(n_padded, 1), embedding_table)
    else:
        # ---- Path B: HBM-resident table + per-row DMA gather. --------------
        # Works for arbitrarily large tables (no VMEM cap) and moves only the
        # rows actually requested (~tokens*D bytes) instead of the whole table.
        out_padded = pl.pallas_call(
            functools.partial(_hbm_gather_kernel, tokens_per_block=tpb),
            out_shape=out_shape,
            grid_spec=pltpu.PrefetchScalarGridSpec(
                num_scalar_prefetch=1,            # flat_idx lands in SMEM
                grid=grid,
                in_specs=[pl.BlockSpec(memory_space=pl.ANY)],   # table in HBM
                out_specs=pl.BlockSpec((tpb, embedding_dim),
                                       lambda i, idx: (i, 0)),
                scratch_shapes=[pltpu.SemaphoreType.DMA((2, _GATHER_GROUP))],
            ),
            compiler_params=pltpu.CompilerParams(
                dimension_semantics=("parallel",),
            ),
        )(flat_idx, embedding_table)

    out = out_padded[:n_tokens] if n_padded != n_tokens else out_padded
    return out.reshape(*orig_shape, embedding_dim)


if __name__ == "__main__":
    key = jax.random.PRNGKey(0)
    k_emb, k_idx, k_emb2, k_idx2 = jax.random.split(key, 4)
    batch, seq = 2, 8

    # Case 1: small vocabulary -> MXU one-hot path.
    vocab_size, embedding_dim = 64, 32
    table = jax.random.normal(k_emb, (vocab_size, embedding_dim),
                              dtype=jnp.float32)
    inputs = jax.random.randint(k_idx, (batch, seq), minval=0,
                                maxval=vocab_size, dtype=jnp.int32)
    out = jax.block_until_ready(word2vec_forward(table, inputs))
    ref = jnp.take(table, inputs, axis=0)
    assert out.shape == (batch, seq, embedding_dim)
    assert jnp.allclose(out, ref), "MXU one-hot path mismatch"

    # Case 2: larger vocabulary -> HBM-resident DMA-gather path.
    vocab_size2, embedding_dim2 = 8192, 96
    table2 = jax.random.normal(k_emb2, (vocab_size2, embedding_dim2),
                               dtype=jnp.float32)
    inputs2 = jax.random.randint(k_idx2, (batch, seq), minval=0,
                                 maxval=vocab_size2, dtype=jnp.int32)
    out2 = jax.block_until_ready(word2vec_forward(table2, inputs2))
    ref2 = jnp.take(table2, inputs2, axis=0)
    assert out2.shape == (batch, seq, embedding_dim2)
    assert jnp.allclose(out2, ref2), "HBM DMA-gather path mismatch"

    print("KERNEL_OK")
</pallas_src>

<mosaic_0001>
module attributes {stable_mosaic.version = 11 : i64} {
  func.func @_onehot_matmul_kernel(%arg0: i32, %arg1: memref<16x1xi32, #tpu.memory_space<vmem>>, %arg2: memref<64x32xf32, #tpu.memory_space<vmem>>, %arg3: memref<16x32xf32, #tpu.memory_space<vmem>>) attributes {dimension_semantics = [#tpu.dimension_semantics<parallel>], iteration_bounds = array<i64: 1>, scalar_prefetch = 0 : i64, scratch_operands = 0 : i64, tpu.core_type = #tpu.core_type<tc>, window_params = [{transform_indices = @transform_0, window_bounds = array<i64: 16, 1>}, {pipeline_mode = #tpu.pipeline_mode<synchronous>, transform_indices = @transform_1, window_bounds = array<i64: 64, 32>}, {transform_indices = @transform_2, window_bounds = array<i64: 16, 32>}]} {
    %c0 = arith.constant 0 : index
    %c0_0 = arith.constant 0 : index
    %0 = vector.load %arg1[%c0, %c0_0] : memref<16x1xi32, #tpu.memory_space<vmem>>, vector<16x1xi32>
    %1 = tpu.iota {dimensions = array<i32: 1>} : vector<16x64xi32>
    %2 = vector.broadcast %0 : vector<16x1xi32> to vector<16x64xi32>
    %3 = arith.cmpi eq, %2, %1 : vector<16x64xi32>
    %4 = arith.extui %3 : vector<16x64xi1> to vector<16x64xi32>
    %5 = arith.sitofp %4 : vector<16x64xi32> to vector<16x64xf32>
    %c0_1 = arith.constant 0 : index
    %c0_2 = arith.constant 0 : index
    %6 = vector.load %arg2[%c0_1, %c0_2] : memref<64x32xf32, #tpu.memory_space<vmem>>, vector<64x32xf32>
    %cst = arith.constant dense<0.000000e+00> : vector<16x32xf32>
    %7 = tpu.matmul %5, %6, %cst {dimension_numbers = #tpu.dot_dimension_numbers<[1], [0], [0], [1], [0, 0, 1, 1], [], []>} : vector<16x64xf32>, vector<64x32xf32>, vector<16x32xf32> -> vector<16x32xf32>
    %c0_3 = arith.constant 0 : index
    %c0_4 = arith.constant 0 : index
    %8 = vector.load %arg3[%c0_3, %c0_4] : memref<16x32xf32, #tpu.memory_space<vmem>>, vector<16x32xf32>
    tpu.vector_store %arg3[%c0_3, %c0_4], %7 {strides = array<i32>} : memref<16x32xf32, #tpu.memory_space<vmem>>, vector<16x32xf32>,
    return
  }
  func.func @transform_0(%arg0: i32) -> (i32, i32) {
    %c0_i32 = arith.constant 0 : i32
    %c0_i32_0 = arith.constant 0 : i32
    return %arg0, %c0_i32 : i32, i32
  }
  func.func @transform_1(%arg0: i32) -> (i32, i32) {
    %c0_i32 = arith.constant 0 : i32
    %c0_i32_0 = arith.constant 0 : i32
    %c0_i32_1 = arith.constant 0 : i32
    return %c0_i32, %c0_i32_0 : i32, i32
  }
  func.func @transform_2(%arg0: i32) -> (i32, i32) {
    %c0_i32 = arith.constant 0 : i32
    %c0_i32_0 = arith.constant 0 : i32
    return %arg0, %c0_i32 : i32, i32
  }
}

</mosaic_0001>

<llo_original>
// kernel: tpu_custom_call.1
$region0: #{tpu_custom_call.1}
  #allocation0 [shape = 'u32[]', space=smem, size = 0x4, offset = 0x4, fixed_abs, tag = 'smem constant byte address 0x4 - core index']
  #allocation1 [shape = 'u32[144,128]{1,0:T(1,128)}', space=vmem, size = 0x12000, scoped, tag = 'internal scratch']
  %s0 = inlined_call_operand.vmem [shape: s32[16,1], index: 0, kind: input, shape index: {}]
  %s1 = inlined_call_operand.vmem [shape: f32[64,32], index: 1, kind: input, shape index: {}]
  %s2 = inlined_call_operand.hbm [shape: f32[16,32], index: 2, kind: output, shape index: {}]
  %s3 = sld [smem:[#allocation0]]
  $region18: #{tpu_custom_call.1} parent=0
    _
  %s5 = ssub.s32 1, %s3
  %s6 = scalar_select 0, %s5, %s3
  $region1: #{tpu_custom_call.1} parent=0
    #allocation2 [shape = 'u8[8192]{0}', space=vmem, size = 0x2000, scoped, tag = 'output window, operand 0, single buffered']
    #allocation3 [shape = 's32[1]{0}', space=sflag, size = 0x4, scoped, tag = 'scoped memory for tpu_custom_call.1']
    %7 = vsyncpa [#allocation3], 0
    // Predicated region
    $region2: #{tpu_custom_call.1} parent=1 // pred_check
      _
    $region3: #{tpu_custom_call.1} parent=1 // pred_check_branch
      %9 = sbr.rel (0) target = $region5
    $region4: #{tpu_custom_call.1} parent=1 // pred_region
      _
    $region5: #{tpu_custom_call.1} parent=1 // pred_fallthru
      _
    // Predicated region
    $region6: #{tpu_custom_call.1} parent=1 // pred_check
      _
    $region7: #{tpu_custom_call.1} parent=1 // pred_check_branch
      %11 = sbr.rel (0) target = $region9
    $region8: #{tpu_custom_call.1} parent=1 // pred_region
      _
    $region9: #{tpu_custom_call.1} parent=1 // pred_fallthru
      _
    %v12 = vld [vmem:[%s0] sm:$0xff]
    %v13 = vld [vmem:[%s0 + $0x8] sm:$0xff]
    %v14 = vlaneseq
    %v15 = vand.u32 %v14, 127
    %16 = vset.pattern.permute.xlu0 0
    %17 = vperm.xlu0 %16, %v12
    %v18 = vpop.permute.xlu0 %17
    %19 = vset.pattern.permute.xlu0 0
    %20 = vperm.xlu0 %19, %v13
    %v21 = vpop.permute.xlu0 %20
    %vm22 = vcmp.eq.s32.totalorder %v18, %v15
    %vm23 = vcmp.eq.s32.totalorder %v21, %v15
    %v24 = vsel %vm22, 1, 0
    %v25 = vsel %vm23, 1, 0
    %v26 = vcvt.s32.f32 %v24
    %v27 = vcvt.s32.f32 %v25
    %v28 = vld [vmem:[%s1] sm:$0xff]
    %v29 = vld [vmem:[%s1 + $0x8] sm:$0xff]
    %v30 = vld [vmem:[%s1 + $0x10] sm:$0xff]
    %v31 = vld [vmem:[%s1 + $0x18] sm:$0xff]
    %v32 = vld [vmem:[%s1 + $0x20] sm:$0xff]
    %v33 = vld [vmem:[%s1 + $0x28] sm:$0xff]
    %v34 = vld [vmem:[%s1 + $0x30] sm:$0xff]
    %v35 = vld [vmem:[%s1 + $0x38] sm:$0xff]
    %vm36 = vcmask 523264
    %v38 = vsel %vm36, %v26, 0
    %v41 = vsel %vm36, %v27, 0
    %43 = vmatprep.subr.mxu0 0.0
    %44 = vmatpush1.msra.mxu0 0.0
    %45 = vmatprep.subr.mxu0 0.0
    %46 = vmatpush1.msra.mxu0 0.0
    %47 = vmatprep.subr.mxu0 0.0
    %48 = vmatpush1.msra.mxu0 0.0
    %49 = vmatprep.subr.mxu0 0.0
    %50 = vmatpush1.msra.mxu0 0.0
    %51 = vmatprep.subr.mxu0 0.0
    %52 = vmatpush1.msra.mxu0 0.0
    %53 = vmatprep.subr.mxu0 0.0
    %54 = vmatpush1.msra.mxu0 0.0
    %55 = vmatprep.subr.mxu0 0.0
    %56 = vmatpush1.msra.mxu0 0.0
    %57 = vmatprep.subr.mxu0 0.0
    %58 = vmatpush1.msra.mxu0 0.0
    %59 = vmatprep.subr.mxu0 0.0
    %60 = vmatpush1.msra.mxu0 %v35
    %61 = vmatprep.subr.mxu0 0.0
    %62 = vmatpush1.msra.mxu0 %v34
    %63 = vmatprep.subr.mxu0 0.0
    %64 = vmatpush1.msra.mxu0 %v33
    %65 = vmatprep.subr.mxu0 0.0
    %66 = vmatpush1.msra.mxu0 %v32
    %67 = vmatprep.subr.mxu0 0.0
    %68 = vmatpush1.msra.mxu0 %v31
    %69 = vmatprep.subr.mxu0 0.0
    %70 = vmatpush1.msra.mxu0 %v30
    %71 = vmatprep.subr.mxu0 0.0
    %72 = vmatpush1.msra.mxu0 %v29
    %73 = vmatprep.subr.mxu0 0.0
    %74 = vmatpush1.msra.mxu0 %v28
    %75 = vmatprep.subr.mxu0 0.0
    %76 = vmatpush2.msra.mxu0 0.0
    %77 = vmatprep.subr.mxu0 0.0
    %78 = vmatpush2.msra.mxu0 0.0
    %79 = vmatprep.subr.mxu0 0.0
    %80 = vmatpush2.msra.mxu0 0.0
    %81 = vmatprep.subr.mxu0 0.0
    %82 = vmatpush2.msra.mxu0 0.0
    %83 = vmatprep.subr.mxu0 0.0
    %84 = vmatpush2.msra.mxu0 0.0
    %85 = vmatprep.subr.mxu0 0.0
    %86 = vmatpush2.msra.mxu0 0.0
    %87 = vmatprep.subr.mxu0 0.0
    %88 = vmatpush2.msra.mxu0 0.0
    %89 = vmatprep.subr.mxu0 0.0
    %90 = vmatpush2.msra.mxu0 0.0
    %91 = vmatprep.subr.mxu0 0.0
    %92 = vmatpush2.msra.mxu0 0.0
    %93 = vmatprep.subr.mxu0 0.0
    %94 = vmatpush2.msra.mxu0 0.0
    %95 = vmatprep.subr.mxu0 0.0
    %96 = vmatpush2.msra.mxu0 0.0
    %97 = vmatprep.subr.mxu0 0.0
    %98 = vmatpush2.msra.mxu0 0.0
    %99 = vmatprep.subr.mxu0 0.0
    %100 = vmatpush2.msra.mxu0 0.0
    %101 = vmatprep.subr.mxu0 0.0
    %102 = vmatpush2.msra.mxu0 0.0
    %103 = vmatprep.subr.mxu0 0.0
    %104 = vmatpush2.msra.mxu0 0.0
    %105 = vmatprep.subr.mxu0 0.0
    %106 = vmatpush2.msra.mxu0 0.0
    %107 = vmatprep.mubr.f32.mxu0 0.0
    %108 = vmatmul.mubr.f32.gmra.mxu0 %v38
    %v109 = vpop.f32.mrf.mxu0
    %v110 = vadd.f32 0.0, %v109
    %v111 = vpop.f32.mrf.mxu0
    %112 = vmatprep.mubr.f32.mxu0 0.0
    %113 = vmatmul.mubr.f32.gmra.mxu0 %v41
    %v114 = vpop.f32.mrf.mxu0
    %v115 = vadd.f32 0.0, %v114
    %v116 = vpop.f32.mrf.mxu0
    %117 = vdwg.mxu0
    %vm118 = vcmask 261120
    %119 = vst.msk [vmem:[#allocation2] sm:$0xff] %vm118, %v110
    %120 = vst.msk [vmem:[#allocation2 + $0x8] sm:$0xff] %vm118, %v115
    // Predicated region
    $region10: #{tpu_custom_call.1} parent=1 // pred_check
      _
    $region11: #{tpu_custom_call.1} parent=1 // pred_check_branch
      %122 = sbr.rel (0) target = $region13
    $region12: #{tpu_custom_call.1} parent=1 // pred_region
      %s124 = ssub.s32 256, 256
      %125 = vsyncadd [#allocation3], %s124
      %s126 = sshll.u32 [#allocation2], 4
      %s127 = int_to_ptr.vmem [resolvable:$true] %s126
      %132 = dma.vmem_to_hbm [thread:$0]  %s127, 256, %s2, [#allocation3], 128, 128, 8
    $region13: #{tpu_custom_call.1} parent=1 // pred_fallthru
      _
    // Predicated region
    $region14: #{tpu_custom_call.1} parent=1 // pred_check
      _
    $region15: #{tpu_custom_call.1} parent=1 // pred_check_branch
      %134 = sbr.rel (0) target = $region17
    $region16: #{tpu_custom_call.1} parent=1 // pred_region
      %135 = dma.done [#allocation3], 256
    $region17: #{tpu_custom_call.1} parent=1 // pred_fallthru
      _
    %136 = vsyncpa [#allocation3], 1

</llo_original>
